<compile_context>
chip_gen: v7x
topology: tpu7x:2x2x1
jax: 0.10.0
libtpu: 0.0.40
codegen_flags: <defaults>
</compile_context>

<pallas_src>
import functools

import jax
import jax.numpy as jnp
import numpy as np
from jax.experimental import pallas as pl
from jax.experimental.pallas import tpu as pltpu

LN_EPS = 1e-5  # nn.LayerNorm default eps


def _round_up(n, m):
    return ((n + m - 1) // m) * m


def _highway_kernel(x_ref, w_ref, b_ref, ln_ref, o_ref, *, d_model, d_pad):
    """Fused highway block.

    One matmul x @ W_fused produces both the inner-layer output (columns
    [0, d_pad)) and the gate logit (column d_pad).  Padded lanes of x / W / b
    are zero, so the layer output z is exactly zero there and one-pass
    LayerNorm sums over all lanes divided by the real d_model are correct.
    """
    x = x_ref[...]                                     # native dtype -> MXU
    yg = jnp.dot(x, w_ref[...], preferred_element_type=jnp.float32)
    yg = yg + b_ref[...].astype(jnp.float32)

    y = yg[:, :d_pad]                                  # layer output (f32)
    g = jax.nn.sigmoid(yg[:, d_pad:d_pad + 1])         # gate, (tm, 1)

    xf = x.astype(jnp.float32)
    # z = x*g + y*(1-g) == y + (x - y)*g
    z = y + (xf - y) * g
    # TODO(synk): dropout(p>0) not implemented (identity == eval mode).

    # One-pass LayerNorm statistics over the real d_model lanes.
    inv_d = jnp.float32(1.0 / d_model)
    s1 = jnp.sum(z, axis=-1, keepdims=True)
    s2 = jnp.sum(z * z, axis=-1, keepdims=True)
    mean = s1 * inv_d
    var = jnp.maximum(s2 * inv_d - mean * mean, 0.0)
    zn = (z - mean) * jax.lax.rsqrt(var + LN_EPS)

    gamma = ln_ref[0:1, :].astype(jnp.float32)
    beta = ln_ref[1:2, :].astype(jnp.float32)
    o_ref[...] = (zn * gamma + beta).astype(o_ref.dtype)


def _rezero_kernel(x_ref, alpha_ref, w_ref, b_ref, o_ref):
    x = x_ref[...]
    y = jnp.dot(x, w_ref[...], preferred_element_type=jnp.float32)
    y = y + b_ref[...].astype(jnp.float32)
    alpha = alpha_ref[0]                               # scalar from SMEM
    o_ref[...] = (x.astype(jnp.float32) + y * alpha).astype(o_ref.dtype)


def highway_block(x, params, *, rezero=False, tm=512):
    B, S, D = x.shape
    M = B * S
    D_pad = _round_up(D, 128)

    # Row tile: as big as requested, shrunk (8-aligned) for tiny problems so
    # we don't over-pad; grid length = M_pad // tm.
    tm = _round_up(min(tm, _round_up(M, 8)), 8)
    M_pad = _round_up(M, tm)

    x2 = x.reshape(M, D)
    if (M_pad, D_pad) != (M, D):
        x2 = jnp.pad(x2, ((0, M_pad - M), (0, D_pad - D)))

    grid = (M_pad // tm,)
    row_spec = pl.BlockSpec((tm, D_pad), lambda i: (i, 0))
    itemsize = jnp.dtype(x.dtype).itemsize

    if rezero:
        w = params["w_layer"]
        w_itemsize = jnp.dtype(w.dtype).itemsize
        w_p = jnp.zeros((D_pad, D_pad), w.dtype).at[:D, :D].set(w)
        b_p = jnp.zeros((1, D_pad), jnp.float32).at[0, :D].set(
            params["b_layer"].reshape(D).astype(jnp.float32))
        alpha = params["alpha"].reshape(1).astype(jnp.float32)

        w_bytes = D_pad * D_pad * w_itemsize
        needed = 4 * tm * D_pad * itemsize + 2 * w_bytes + (1 << 20)
        cost = pl.CostEstimate(
            flops=2 * M_pad * D_pad * D_pad,
            transcendentals=0,
            bytes_accessed=2 * M_pad * D_pad * itemsize + w_bytes)

        out = pl.pallas_call(
            _rezero_kernel,
            out_shape=jax.ShapeDtypeStruct((M_pad, D_pad), x.dtype),
            grid=grid,
            in_specs=[
                row_spec,
                pl.BlockSpec(memory_space=pltpu.MemorySpace.SMEM),   # alpha
                pl.BlockSpec((D_pad, D_pad), lambda i: (0, 0)),      # weight
                pl.BlockSpec((1, D_pad), lambda i: (0, 0)),          # bias
            ],
            out_specs=row_spec,
            compiler_params=pltpu.CompilerParams(
                dimension_semantics=("parallel",),
                vmem_limit_bytes=int(min(max(2 * needed, 32 << 20), 64 << 20))),
            cost_estimate=cost,
        )(x2, alpha, w_p, b_p)
    else:
        # Fused weight: layer columns [0, D_pad), gate column at D_pad,
        # padded to N_pad = D_pad + 128 lanes (lane-dense MXU output).
        N_pad = D_pad + 128
        w_l = params["w_layer"]
        w_itemsize = jnp.dtype(w_l.dtype).itemsize
        w_g = params["w_gate"].reshape(D, 1).astype(w_l.dtype)
        w_fused = jnp.zeros((D_pad, N_pad), w_l.dtype)
        w_fused = w_fused.at[:D, :D].set(w_l)
        w_fused = w_fused.at[:D, D_pad:D_pad + 1].set(w_g)

        b_fused = jnp.zeros((1, N_pad), jnp.float32)
        b_fused = b_fused.at[0, :D].set(
            params["b_layer"].reshape(D).astype(jnp.float32))
        b_fused = b_fused.at[0, D_pad].set(
            params["b_gate"].reshape(()).astype(jnp.float32))

        ln = jnp.zeros((2, D_pad), jnp.float32)
        ln = ln.at[0, :D].set(params["gamma"].reshape(D).astype(jnp.float32))
        ln = ln.at[1, :D].set(params["beta"].reshape(D).astype(jnp.float32))

        w_bytes = D_pad * N_pad * w_itemsize
        needed = (4 * tm * D_pad * itemsize + 2 * w_bytes
                  + 8 * (N_pad + 2 * D_pad) + (1 << 20))
        cost = pl.CostEstimate(
            flops=2 * M_pad * D_pad * N_pad + 12 * M_pad * D_pad,
            transcendentals=2 * M_pad,
            bytes_accessed=2 * M_pad * D_pad * itemsize + w_bytes)

        kernel = functools.partial(_highway_kernel, d_model=D, d_pad=D_pad)
        out = pl.pallas_call(
            kernel,
            out_shape=jax.ShapeDtypeStruct((M_pad, D_pad), x.dtype),
            grid=grid,
            in_specs=[
                row_spec,
                pl.BlockSpec((D_pad, N_pad), lambda i: (0, 0)),   # fused W
                pl.BlockSpec((1, N_pad), lambda i: (0, 0)),       # fused bias
                pl.BlockSpec((2, D_pad), lambda i: (0, 0)),       # gamma/beta
            ],
            out_specs=row_spec,
            compiler_params=pltpu.CompilerParams(
                dimension_semantics=("parallel",),
                vmem_limit_bytes=int(min(max(2 * needed, 32 << 20), 64 << 20))),
            cost_estimate=cost,
        )(x2, w_fused, b_fused, ln)

    return out[:M, :D].reshape(B, S, D)


def _reference(x, params, *, rezero=False):
    D = x.shape[-1]
    xf = x.astype(jnp.float32)
    y = xf @ params["w_layer"] + params["b_layer"].reshape(1, D)
    if rezero:
        return xf + y * params["alpha"].reshape(())
    g = jax.nn.sigmoid(xf @ params["w_gate"].reshape(D, 1)
                       + params["b_gate"].reshape(()))
    z = xf * g + y * (1.0 - g)
    mean = jnp.mean(z, axis=-1, keepdims=True)
    var = jnp.mean((z - mean) ** 2, axis=-1, keepdims=True)
    zn = (z - mean) * jax.lax.rsqrt(var + LN_EPS)
    return zn * params["gamma"].reshape(1, D) + params["beta"].reshape(1, D)


if __name__ == "__main__":
    B, S, D = 2, 8, 32  # batch=2, seq=8, d_model=32
    key = jax.random.PRNGKey(0)
    kx, kwl, kbl, kwg, kbg = jax.random.split(key, 5)

    x = jax.random.normal(kx, (B, S, D), dtype=jnp.float32)

    params = {
        # inner layer: Linear(d_model, d_model)
        "w_layer": jax.random.normal(kwl, (D, D), dtype=jnp.float32) * 0.05,
        "b_layer": jax.random.normal(kbl, (1, D), dtype=jnp.float32) * 0.05,
        # gate: FeedForward(d_model, 1) ~ Linear(d_model, 1)
        "w_gate": jax.random.normal(kwg, (D, 1), dtype=jnp.float32) * 0.05,
        "b_gate": jax.random.normal(kbg, (1, 1), dtype=jnp.float32) * 0.05,
        # LayerNorm(d_model): default init gamma=1, beta=0
        "gamma": jnp.ones((1, D), dtype=jnp.float32),
        "beta": jnp.zeros((1, D), dtype=jnp.float32),
        # rezero parameter (init is torch.zeros(1); nonzero here to exercise path)
        "alpha": jnp.full((1, 1), 0.25, dtype=jnp.float32),
    }

    out = highway_block(x, params, rezero=False)
    out = jax.block_until_ready(out)
    ref = _reference(x.reshape(B * S, D), params).reshape(B, S, D)
    np.testing.assert_allclose(np.asarray(out), np.asarray(ref),
                               atol=1e-5, rtol=1e-5)

    out_rz = highway_block(x, params, rezero=True)
    out_rz = jax.block_until_ready(out_rz)
    ref_rz = _reference(x.reshape(B * S, D), params,
                        rezero=True).reshape(B, S, D)
    np.testing.assert_allclose(np.asarray(out_rz), np.asarray(ref_rz),
                               atol=1e-5, rtol=1e-5)

    print("KERNEL_OK")
</pallas_src>

<mosaic_0001>
module attributes {stable_mosaic.version = 11 : i64} {
  func.func @_highway_kernel(%arg0: i32, %arg1: memref<16x128xf32, #tpu.memory_space<vmem>>, %arg2: memref<128x256xf32, #tpu.memory_space<vmem>>, %arg3: memref<1x256xf32, #tpu.memory_space<vmem>>, %arg4: memref<2x128xf32, #tpu.memory_space<vmem>>, %arg5: memref<16x128xf32, #tpu.memory_space<vmem>>) attributes {dimension_semantics = [#tpu.dimension_semantics<parallel>], iteration_bounds = array<i64: 1>, scalar_prefetch = 0 : i64, scratch_operands = 0 : i64, tpu.core_type = #tpu.core_type<tc>, window_params = [{transform_indices = @transform_0, window_bounds = array<i64: 16, 128>}, {pipeline_mode = #tpu.pipeline_mode<synchronous>, transform_indices = @transform_1, window_bounds = array<i64: 128, 256>}, {pipeline_mode = #tpu.pipeline_mode<synchronous>, transform_indices = @transform_2, window_bounds = array<i64: 1, 256>}, {pipeline_mode = #tpu.pipeline_mode<synchronous>, transform_indices = @transform_3, window_bounds = array<i64: 2, 128>}, {transform_indices = @transform_4, window_bounds = array<i64: 16, 128>}]} {
    %c0 = arith.constant 0 : index
    %c0_0 = arith.constant 0 : index
    %0 = vector.load %arg1[%c0, %c0_0] : memref<16x128xf32, #tpu.memory_space<vmem>>, vector<16x128xf32>
    %c0_1 = arith.constant 0 : index
    %c0_2 = arith.constant 0 : index
    %1 = vector.load %arg2[%c0_1, %c0_2] : memref<128x256xf32, #tpu.memory_space<vmem>>, vector<128x256xf32>
    %cst = arith.constant dense<0.000000e+00> : vector<16x256xf32>
    %2 = tpu.matmul %0, %1, %cst {dimension_numbers = #tpu.dot_dimension_numbers<[1], [0], [0], [1], [0, 0, 1, 1], [], []>} : vector<16x128xf32>, vector<128x256xf32>, vector<16x256xf32> -> vector<16x256xf32>
    %c0_3 = arith.constant 0 : index
    %c0_4 = arith.constant 0 : index
    %3 = vector.load %arg3[%c0_3, %c0_4] : memref<1x256xf32, #tpu.memory_space<vmem>>, vector<1x256xf32>
    %4 = vector.broadcast %3 : vector<1x256xf32> to vector<16x256xf32>
    %5 = arith.addf %2, %4 : vector<16x256xf32>
    %6 = vector.extract_strided_slice %5 {offsets = [0, 0], sizes = [16, 128], strides = [1, 1]} : vector<16x256xf32> to vector<16x128xf32>
    %7 = vector.extract_strided_slice %5 {offsets = [0, 128], sizes = [16, 1], strides = [1, 1]} : vector<16x256xf32> to vector<16x1xf32>
    %8 = arith.negf %7 : vector<16x1xf32>
    %9 = math.exp %8 : vector<16x1xf32>
    %cst_5 = arith.constant 1.000000e+00 : f32
    %10 = vector.broadcast %cst_5 : f32 to vector<16x1xf32>
    %11 = arith.addf %10, %9 : vector<16x1xf32>
    %12 = arith.divf %10, %11 : vector<16x1xf32>
    %13 = arith.subf %0, %6 : vector<16x128xf32>
    %14 = vector.broadcast %12 : vector<16x1xf32> to vector<16x128xf32>
    %15 = arith.mulf %13, %14 : vector<16x128xf32>
    %16 = arith.addf %6, %15 : vector<16x128xf32>
    %cst_6 = arith.constant dense<0.000000e+00> : vector<16xf32>
    %17 = vector.multi_reduction <add>, %16, %cst_6 [1] : vector<16x128xf32> to vector<16xf32>
    %18 = vector.shape_cast %17 : vector<16xf32> to vector<16x1xf32>
    %19 = arith.mulf %16, %16 : vector<16x128xf32>
    %cst_7 = arith.constant dense<0.000000e+00> : vector<16xf32>
    %20 = vector.multi_reduction <add>, %19, %cst_7 [1] : vector<16x128xf32> to vector<16xf32>
    %21 = vector.shape_cast %20 : vector<16xf32> to vector<16x1xf32>
    %cst_8 = arith.constant 3.125000e-02 : f32
    %22 = vector.broadcast %cst_8 : f32 to vector<16x1xf32>
    %23 = arith.mulf %18, %22 : vector<16x1xf32>
    %cst_9 = arith.constant 3.125000e-02 : f32
    %24 = vector.broadcast %cst_9 : f32 to vector<16x1xf32>
    %25 = arith.mulf %21, %24 : vector<16x1xf32>
    %26 = arith.mulf %23, %23 : vector<16x1xf32>
    %27 = arith.subf %25, %26 : vector<16x1xf32>
    %cst_10 = arith.constant 0.000000e+00 : f32
    %28 = vector.broadcast %cst_10 : f32 to vector<16x1xf32>
    %29 = arith.maximumf %27, %28 : vector<16x1xf32>
    %30 = vector.broadcast %23 : vector<16x1xf32> to vector<16x128xf32>
    %31 = arith.subf %16, %30 : vector<16x128xf32>
    %cst_11 = arith.constant 9.99999974E-6 : f32
    %32 = vector.broadcast %cst_11 : f32 to vector<16x1xf32>
    %33 = arith.addf %29, %32 : vector<16x1xf32>
    %34 = math.rsqrt %33 : vector<16x1xf32>
    %35 = vector.broadcast %34 : vector<16x1xf32> to vector<16x128xf32>
    %36 = arith.mulf %31, %35 : vector<16x128xf32>
    %c0_12 = arith.constant 0 : index
    %c0_13 = arith.constant 0 : index
    %37 = vector.load %arg4[%c0_12, %c0_13] : memref<2x128xf32, #tpu.memory_space<vmem>>, vector<1x128xf32>
    %c1 = arith.constant 1 : index
    %c0_14 = arith.constant 0 : index
    %38 = vector.load %arg4[%c1, %c0_14] : memref<2x128xf32, #tpu.memory_space<vmem>>, vector<1x128xf32>
    %39 = vector.broadcast %37 : vector<1x128xf32> to vector<16x128xf32>
    %40 = arith.mulf %36, %39 : vector<16x128xf32>
    %41 = vector.broadcast %38 : vector<1x128xf32> to vector<16x128xf32>
    %42 = arith.addf %40, %41 : vector<16x128xf32>
    %c0_15 = arith.constant 0 : index
    %c0_16 = arith.constant 0 : index
    %43 = vector.load %arg5[%c0_15, %c0_16] : memref<16x128xf32, #tpu.memory_space<vmem>>, vector<16x128xf32>
    tpu.vector_store %arg5[%c0_15, %c0_16], %42 {strides = array<i32>} : memref<16x128xf32, #tpu.memory_space<vmem>>, vector<16x128xf32>,
    return
  }
  func.func @transform_0(%arg0: i32) -> (i32, i32) {
    %c0_i32 = arith.constant 0 : i32
    %c0_i32_0 = arith.constant 0 : i32
    return %arg0, %c0_i32 : i32, i32
  }
  func.func @transform_1(%arg0: i32) -> (i32, i32) {
    %c0_i32 = arith.constant 0 : i32
    %c0_i32_0 = arith.constant 0 : i32
    %c0_i32_1 = arith.constant 0 : i32
    return %c0_i32, %c0_i32_0 : i32, i32
  }
  func.func @transform_2(%arg0: i32) -> (i32, i32) {
    %c0_i32 = arith.constant 0 : i32
    %c0_i32_0 = arith.constant 0 : i32
    %c0_i32_1 = arith.constant 0 : i32
    return %c0_i32, %c0_i32_0 : i32, i32
  }
  func.func @transform_3(%arg0: i32) -> (i32, i32) {
    %c0_i32 = arith.constant 0 : i32
    %c0_i32_0 = arith.constant 0 : i32
    %c0_i32_1 = arith.constant 0 : i32
    return %c0_i32, %c0_i32_0 : i32, i32
  }
  func.func @transform_4(%arg0: i32) -> (i32, i32) {
    %c0_i32 = arith.constant 0 : i32
    %c0_i32_0 = arith.constant 0 : i32
    return %arg0, %c0_i32 : i32, i32
  }
}

</mosaic_0001>

<llo_original>
// kernel: tpu_custom_call.1
$region0: #{tpu_custom_call.1}
  #allocation0 [shape = 'u32[]', space=smem, size = 0x4, offset = 0x4, fixed_abs, tag = 'smem constant byte address 0x4 - core index']
  #allocation1 [shape = 'u32[144,128]{1,0:T(1,128)}', space=vmem, size = 0x12000, scoped, tag = 'internal scratch']
  %s0 = inlined_call_operand.hbm [shape: f32[16,128], index: 0, kind: input, shape index: {}]
  %s1 = inlined_call_operand.hbm [shape: f32[128,256], index: 1, kind: input, shape index: {}]
  %s2 = inlined_call_operand.vmem [shape: f32[1,256], index: 2, kind: input, shape index: {}]
  %s3 = inlined_call_operand.vmem [shape: f32[2,128], index: 3, kind: input, shape index: {}]
  %s4 = inlined_call_operand.hbm [shape: f32[16,128], index: 4, kind: output, shape index: {}]
  %s5 = sld [smem:[#allocation0]]
  $region34: #{tpu_custom_call.1} parent=0
    _
  %s7 = ssub.s32 1, %s5
  %s8 = scalar_select 0, %s7, %s5
  $region1: #{tpu_custom_call.1} parent=0
    #allocation2 [shape = 'u8[8192]{0}', space=vmem, size = 0x2000, scoped, tag = 'input window, operand 0, single buffered']
    #allocation3 [shape = 's32[1]{0}', space=sflag, size = 0x4, scoped, tag = 'scoped memory for tpu_custom_call.1']
    #allocation4 [shape = 's32[1]{0}', space=sflag, size = 0x4, scoped, tag = 'scoped memory for tpu_custom_call.1']
    #allocation5 [shape = 'u8[131072]{0}', space=vmem, size = 0x20000, scoped, tag = 'input window, operand 1, single buffered']
    #allocation6 [shape = 's32[1]{0}', space=sflag, size = 0x4, scoped, tag = 'scoped memory for tpu_custom_call.1']
    #allocation7 [shape = 'u8[8192]{0}', space=vmem, size = 0x2000, scoped, tag = 'output window, operand 0, single buffered']
    %9 = vsyncpa [#allocation3], 0
    %10 = vsyncpa [#allocation6], 0
    %11 = vsyncpa [#allocation4], 0
    // Predicated region
    $region2: #{tpu_custom_call.1} parent=1 // pred_check
      _
    $region3: #{tpu_custom_call.1} parent=1 // pred_check_branch
      %13 = sbr.rel (0) target = $region5
    $region4: #{tpu_custom_call.1} parent=1 // pred_region
      %s15 = ssub.s32 256, 256
      %16 = vsyncadd [#allocation3], %s15
      %s17 = sshll.u32 [#allocation2], 4
      %s18 = int_to_ptr.vmem [resolvable:$true] %s17
      %23 = dma.hbm_to_vmem [thread:$0]  %s0, 256, %s18, [#allocation3], 128, 128, 8
    $region5: #{tpu_custom_call.1} parent=1 // pred_fallthru
      _
    // Predicated region
    $region6: #{tpu_custom_call.1} parent=1 // pred_check
      _
    $region7: #{tpu_custom_call.1} parent=1 // pred_check_branch
      %25 = sbr.rel (0) target = $region9
    $region8: #{tpu_custom_call.1} parent=1 // pred_region
      %s27 = ssub.s32 4096, 4096
      %28 = vsyncadd [#allocation6], %s27
      %s29 = sshll.u32 [#allocation5], 4
      %s30 = int_to_ptr.vmem [resolvable:$true] %s29
      %35 = dma.hbm_to_vmem [thread:$0]  %s1, 4096, %s30, [#allocation6], 256, 256, 16
    $region9: #{tpu_custom_call.1} parent=1 // pred_fallthru
      _
    // Predicated region
    $region10: #{tpu_custom_call.1} parent=1 // pred_check
      _
    $region11: #{tpu_custom_call.1} parent=1 // pred_check_branch
      %37 = sbr.rel (0) target = $region13
    $region12: #{tpu_custom_call.1} parent=1 // pred_region
      _
    $region13: #{tpu_custom_call.1} parent=1 // pred_fallthru
      _
    // Predicated region
    $region14: #{tpu_custom_call.1} parent=1 // pred_check
      _
    $region15: #{tpu_custom_call.1} parent=1 // pred_check_branch
      %39 = sbr.rel (0) target = $region17
    $region16: #{tpu_custom_call.1} parent=1 // pred_region
      _
    $region17: #{tpu_custom_call.1} parent=1 // pred_fallthru
      _
    // Predicated region
    $region18: #{tpu_custom_call.1} parent=1 // pred_check
      _
    $region19: #{tpu_custom_call.1} parent=1 // pred_check_branch
      %41 = sbr.rel (0) target = $region21
    $region20: #{tpu_custom_call.1} parent=1 // pred_region
      %42 = dma.done [#allocation3], 256
    $region21: #{tpu_custom_call.1} parent=1 // pred_fallthru
      _
    // Predicated region
    $region22: #{tpu_custom_call.1} parent=1 // pred_check
      _
    $region23: #{tpu_custom_call.1} parent=1 // pred_check_branch
      %44 = sbr.rel (0) target = $region25
    $region24: #{tpu_custom_call.1} parent=1 // pred_region
      %45 = dma.done [#allocation6], 4096
    $region25: #{tpu_custom_call.1} parent=1 // pred_fallthru
      _
    %v46 = vld [vmem:[#allocation2] sm:$0xff]
    %v47 = vld [vmem:[#allocation2 + $0x8] sm:$0xff]
    %v48 = vld [vmem:[#allocation5] sm:$0xff]
    %v49 = vld [vmem:[#allocation5 + $0x8] sm:$0xff]
    %v50 = vld [vmem:[#allocation5 + $0x10] sm:$0xff]
    %v51 = vld [vmem:[#allocation5 + $0x18] sm:$0xff]
    %v52 = vld [vmem:[#allocation5 + $0x20] sm:$0xff]
    %v53 = vld [vmem:[#allocation5 + $0x28] sm:$0xff]
    %v54 = vld [vmem:[#allocation5 + $0x30] sm:$0xff]
    %v55 = vld [vmem:[#allocation5 + $0x38] sm:$0xff]
    %v56 = vld [vmem:[#allocation5 + $0x40] sm:$0xff]
    %v57 = vld [vmem:[#allocation5 + $0x48] sm:$0xff]
    %v58 = vld [vmem:[#allocation5 + $0x50] sm:$0xff]
    %v59 = vld [vmem:[#allocation5 + $0x58] sm:$0xff]
    %v60 = vld [vmem:[#allocation5 + $0x60] sm:$0xff]
    %v61 = vld [vmem:[#allocation5 + $0x68] sm:$0xff]
    %v62 = vld [vmem:[#allocation5 + $0x70] sm:$0xff]
    %v63 = vld [vmem:[#allocation5 + $0x78] sm:$0xff]
    %v64 = vld [vmem:[#allocation5 + $0x80] sm:$0xff]
    %v65 = vld [vmem:[#allocation5 + $0x88] sm:$0xff]
    %v66 = vld [vmem:[#allocation5 + $0x90] sm:$0xff]
    %v67 = vld [vmem:[#allocation5 + $0x98] sm:$0xff]
    %v68 = vld [vmem:[#allocation5 + $0xa0] sm:$0xff]
    %v69 = vld [vmem:[#allocation5 + $0xa8] sm:$0xff]
    %v70 = vld [vmem:[#allocation5 + $0xb0] sm:$0xff]
    %v71 = vld [vmem:[#allocation5 + $0xb8] sm:$0xff]
    %v72 = vld [vmem:[#allocation5 + $0xc0] sm:$0xff]
    %v73 = vld [vmem:[#allocation5 + $0xc8] sm:$0xff]
    %v74 = vld [vmem:[#allocation5 + $0xd0] sm:$0xff]
    %v75 = vld [vmem:[#allocation5 + $0xd8] sm:$0xff]
    %v76 = vld [vmem:[#allocation5 + $0xe0] sm:$0xff]
    %v77 = vld [vmem:[#allocation5 + $0xe8] sm:$0xff]
    %v78 = vld [vmem:[#allocation5 + $0xf0] sm:$0xff]
    %v79 = vld [vmem:[#allocation5 + $0xf8] sm:$0xff]
    %v80 = vld [vmem:[%s2] sm:$0x3]
    %v82 = vlaneseq
    %v83 = vshrl.u32 %v82, 7
    %v84 = vsub.s32 0, %v83
    %v85 = vrot.slane %v80, %v84
    %v86 = vlaneseq
    %v87 = vshrl.u32 %v86, 7
    %v88 = vsub.s32 1, %v87
    %v89 = vrot.slane %v80, %v88
    %92 = vmatprep.subr.mxu0 %v49
    %93 = vmatpush1.msra.mxu0 %v48
    %94 = vmatprep.subr.mxu0 %v51
    %95 = vmatpush1.msra.mxu0 %v50
    %96 = vmatprep.subr.mxu0 %v53
    %97 = vmatpush1.msra.mxu0 %v52
    %98 = vmatprep.subr.mxu0 %v55
    %99 = vmatpush1.msra.mxu0 %v54
    %100 = vmatprep.subr.mxu0 %v57
    %101 = vmatpush1.msra.mxu0 %v56
    %102 = vmatprep.subr.mxu0 %v59
    %103 = vmatpush1.msra.mxu0 %v58
    %104 = vmatprep.subr.mxu0 %v61
    %105 = vmatpush1.msra.mxu0 %v60
    %106 = vmatprep.subr.mxu0 %v63
    %107 = vmatpush1.msra.mxu0 %v62
    %108 = vmatprep.subr.mxu0 %v65
    %109 = vmatpush1.msra.mxu0 %v64
    %110 = vmatprep.subr.mxu0 %v67
    %111 = vmatpush1.msra.mxu0 %v66
    %112 = vmatprep.subr.mxu0 %v69
    %113 = vmatpush1.msra.mxu0 %v68
    %114 = vmatprep.subr.mxu0 %v71
    %115 = vmatpush1.msra.mxu0 %v70
    %116 = vmatprep.subr.mxu0 %v73
    %117 = vmatpush1.msra.mxu0 %v72
    %118 = vmatprep.subr.mxu0 %v75
    %119 = vmatpush1.msra.mxu0 %v74
    %120 = vmatprep.subr.mxu0 %v77
    %121 = vmatpush1.msra.mxu0 %v76
    %122 = vmatprep.subr.mxu0 %v79
    %123 = vmatpush1.msra.mxu0 %v78
    %124 = vmatprep.subr.mxu0 0.0
    %125 = vmatpush1.msra.mxu0 0.0
    %126 = vmatprep.subr.mxu0 0.0
    %127 = vmatpush1.msra.mxu0 0.0
    %128 = vmatprep.subr.mxu0 0.0
    %129 = vmatpush1.msra.mxu0 0.0
    %130 = vmatprep.subr.mxu0 0.0
    %131 = vmatpush1.msra.mxu0 0.0
    %132 = vmatprep.subr.mxu0 0.0
    %133 = vmatpush1.msra.mxu0 0.0
    %134 = vmatprep.subr.mxu0 0.0
    %135 = vmatpush1.msra.mxu0 0.0
    %136 = vmatprep.subr.mxu0 0.0
    %137 = vmatpush1.msra.mxu0 0.0
    %138 = vmatprep.subr.mxu0 0.0
    %139 = vmatpush1.msra.mxu0 0.0
    %140 = vmatprep.subr.mxu0 0.0
    %141 = vmatpush1.msra.mxu0 0.0
    %142 = vmatprep.subr.mxu0 0.0
    %143 = vmatpush1.msra.mxu0 0.0
    %144 = vmatprep.subr.mxu0 0.0
    %145 = vmatpush1.msra.mxu0 0.0
    %146 = vmatprep.subr.mxu0 0.0
    %147 = vmatpush1.msra.mxu0 0.0
    %148 = vmatprep.subr.mxu0 0.0
    %149 = vmatpush1.msra.mxu0 0.0
    %150 = vmatprep.subr.mxu0 0.0
    %151 = vmatpush1.msra.mxu0 0.0
    %152 = vmatprep.subr.mxu0 0.0
    %153 = vmatpush1.msra.mxu0 0.0
    %154 = vmatprep.subr.mxu0 0.0
    %155 = vmatpush1.msra.mxu0 0.0
    %156 = vmatprep.mubr.f32.mxu0 0.0
    %157 = vmatmul.mubr.f32.gmra.mrb[0].mxu0 %v46
    %v158 = vpop.f32.mrb[0].mxu0
    %v159 = vadd.f32 %v85, %v158
    %v160 = vpop.f32.mrb[0].mxu0
    %v161 = vadd.f32 %v89, %v160
    %162 = vmatprep.mubr.f32.mxu0 0.0
    %163 = vmatmul.mubr.f32.gmra.mrb[0].mxu0 %v47
    %v164 = vpop.f32.mrb[0].mxu0
    %v165 = vadd.f32 %v85, %v164
    %v166 = vpop.f32.mrb[0].mxu0
    %v167 = vadd.f32 %v89, %v166
    %168 = vdwg.mxu0
    %v169 = vxor.u32 %v161, 2147483648
    %v170 = vxor.u32 %v167, 2147483648
    %v171 = vmul.f32 %v169, 1.442695
    %v172 = vpow.pop %v171
    %v173 = vmul.f32 %v170, 1.442695
    %v174 = vpow.pop %v173
    %v175 = vadd.f32 %v172, 1.0
    %v176 = vadd.f32 %v174, 1.0
    %v177 = vrcp.pop %v175
    %v178 = vmul.f32 1.0, %v177
    %v179 = vrcp.pop %v176
    %v180 = vmul.f32 1.0, %v179
    %v181 = vsub.f32 %v46, %v159
    %v182 = vsub.f32 %v47, %v165
    %184 = vset.pattern.permute.xlu0 0
    %185 = vperm.xlu0 %184, %v178
    %v186 = vpop.permute.xlu0 %185
    %189 = vset.pattern.permute.xlu0 0
    %190 = vperm.xlu0 %189, %v180
    %v191 = vpop.permute.xlu0 %190
    %v193 = vmul.f32 %v181, %v186
    %v194 = vmul.f32 %v182, %v191
    %v195 = vadd.f32 %v159, %v193
    %v196 = vadd.f32 %v165, %v194
    %197 = vadd.xlane.f32.xlu0 %v195
    %v198 = vpop.xlane.xlu0 %197
    %199 = vadd.xlane.f32.xlu0 %v196
    %v200 = vpop.xlane.xlu0 %199
    %v201 = vmul.f32 %v195, %v195
    %v202 = vmul.f32 %v196, %v196
    %203 = vadd.xlane.f32.xlu0 %v201
    %v204 = vpop.xlane.xlu0 %203
    %205 = vadd.xlane.f32.xlu0 %v202
    %v206 = vpop.xlane.xlu0 %205
    %v207 = vmul.f32 %v198, 0.03125
    %v208 = vmul.f32 %v200, 0.03125
    %v209 = vmul.f32 %v204, 0.03125
    %v210 = vmul.f32 %v206, 0.03125
    %v211 = vmul.f32 %v207, %v207
    %v212 = vmul.f32 %v208, %v208
    %v213 = vsub.f32 %v209, %v211
    %v214 = vsub.f32 %v210, %v212
    %v215 = vmax.f32 %v213, 0.0
    %v216 = vmax.f32 %v214, 0.0
    %v217 = vsub.f32 %v195, %v207
    %v218 = vsub.f32 %v196, %v208
    %v219 = vadd.f32 %v215, 1e-05
    %v220 = vadd.f32 %v216, 1e-05
    %v221 = vrsqrt.pop %v219
    %v222 = vrsqrt.pop %v220
    %v223 = vmul.f32 %v217, %v221
    %v224 = vmul.f32 %v218, %v222
    %v225 = vld [vmem:[%s3] sm:$0x1]
    %v226 = vld [vmem:[%s3 + $0x1] sm:$0x1]
    %v227 = vlaneseq
    %v228 = vshrl.u32 %v227, 7
    %v229 = vsub.s32 0, %v228
    %v230 = vrot.slane %v225, %v229
    %v231 = vmul.f32 %v223, %v230
    %v232 = vmul.f32 %v224, %v230
    %v233 = vlaneseq
    %v234 = vshrl.u32 %v233, 7
    %v235 = vsub.s32 0, %v234
    %v236 = vrot.slane %v226, %v235
    %v237 = vadd.f32 %v231, %v236
    %v238 = vadd.f32 %v232, %v236
    %239 = vst [vmem:[#allocation7] sm:$0xff] %v237
    %240 = vst [vmem:[#allocation7 + $0x8] sm:$0xff] %v238
    // Predicated region
    $region26: #{tpu_custom_call.1} parent=1 // pred_check
      _
    $region27: #{tpu_custom_call.1} parent=1 // pred_check_branch
      %242 = sbr.rel (0) target = $region29
    $region28: #{tpu_custom_call.1} parent=1 // pred_region
      %s244 = ssub.s32 256, 256
      %245 = vsyncadd [#allocation4], %s244
      %s246 = sshll.u32 [#allocation7], 4
      %s247 = int_to_ptr.vmem [resolvable:$true] %s246
      %252 = dma.vmem_to_hbm [thread:$0]  %s247, 256, %s4, [#allocation4], 128, 128, 8
    $region29: #{tpu_custom_call.1} parent=1 // pred_fallthru
      _
    // Predicated region
    $region30: #{tpu_custom_call.1} parent=1 // pred_check
      _
    $region31: #{tpu_custom_call.1} parent=1 // pred_check_branch
      %254 = sbr.rel (0) target = $region33
    $region32: #{tpu_custom_call.1} parent=1 // pred_region
      %255 = dma.done [#allocation4], 256
    $region33: #{tpu_custom_call.1} parent=1 // pred_fallthru
      _
    %256 = vsyncpa [#allocation3], 1
    %257 = vsyncpa [#allocation6], 1
    %258 = vsyncpa [#allocation4], 1

</llo_original>
